<compile_context>
chip_gen: v6e
topology: v6e:2x2x1
jax: 0.10.0
libtpu: 0.0.40
codegen_flags: <defaults>
</compile_context>

<pallas_src>
import jax
import jax.numpy as jnp
from jax.experimental import pallas as pl
from jax.experimental.pallas import tpu as pltpu

D_IN = 784          # 28 * 28
D_IN_PAD = 896      # 7 * 128  (lane-aligned input width)
HIDDEN = 128
D_OUT = 10
D_OUT_PAD = 128     # lane-dense output width (cols 10..127 are zero)


def seednet_kernel(x_ref, w1_ref, b1_ref, w2_ref, b2_ref, o_ref):
    # fc1: bf16 MXU matmul, f32 accumulate; epilogue (bias + ReLU) in f32.
    h = jnp.dot(x_ref[...], w1_ref[...], preferred_element_type=jnp.float32)
    h = jnp.maximum(h + b1_ref[...], 0.0)
    # fc2: cast hidden to bf16 for the MXU, accumulate in f32, add bias in f32.
    out = jnp.dot(h.astype(jnp.bfloat16), w2_ref[...],
                  preferred_element_type=jnp.float32)
    o_ref[...] = (out + b2_ref[...]).astype(o_ref.dtype)


def _pick_tm(batch):
    # Fill MXU rows (>=128) without over-padding tiny batches; cap at 512.
    return int(min(512, max(128, pl.cdiv(batch, 128) * 128)))


def seednet_forward(x_nchw, w1, b1, w2, b2):
    """x_nchw: [B, 1, 28, 28] f32.  Returns [B, 10] f32 logits."""
    B = x_nchw.shape[0]
    tm = _pick_tm(B)
    m_pad = pl.cdiv(B, tm) * tm

    # Flatten like torch .view(-1, 784), cast MXU operand to bf16, pad
    # features 784->896 and batch rows B->m_pad with zeros.
    x = x_nchw.reshape(B, D_IN).astype(jnp.bfloat16)
    x = jnp.pad(x, ((0, m_pad - B), (0, D_IN_PAD - D_IN)))

    # Pad weights once: w1 gets zero rows for the padded input columns,
    # w2/b2 get zero output columns 10..127 (logits unaffected).
    w1p = jnp.pad(w1, ((0, D_IN_PAD - D_IN), (0, 0))).astype(jnp.bfloat16)
    w2p = jnp.pad(w2, ((0, 0), (0, D_OUT_PAD - D_OUT))).astype(jnp.bfloat16)
    b1p = b1.reshape(1, HIDDEN).astype(jnp.float32)
    b2p = jnp.pad(b2.reshape(1, D_OUT),
                  ((0, 0), (0, D_OUT_PAD - D_OUT))).astype(jnp.float32)

    grid = (m_pad // tm,)

    cost = pl.CostEstimate(
        flops=2 * m_pad * (D_IN_PAD * HIDDEN + HIDDEN * D_OUT_PAD),
        transcendentals=0,
        bytes_accessed=(x.size * 2 + w1p.size * 2 + w2p.size * 2
                        + b1p.size * 4 + b2p.size * 4
                        + m_pad * D_OUT_PAD * 4),
    )

    out = pl.pallas_call(
        seednet_kernel,
        out_shape=jax.ShapeDtypeStruct((m_pad, D_OUT_PAD), jnp.float32),
        grid_spec=pltpu.PrefetchScalarGridSpec(
            num_scalar_prefetch=0,
            grid=grid,
            in_specs=[
                # activations: tiled over the batch grid axis
                pl.BlockSpec((tm, D_IN_PAD), lambda i: (i, 0)),
                # weights / biases: constant index_map -> VMEM-resident
                pl.BlockSpec((D_IN_PAD, HIDDEN), lambda i: (0, 0)),
                pl.BlockSpec((1, HIDDEN), lambda i: (0, 0)),
                pl.BlockSpec((HIDDEN, D_OUT_PAD), lambda i: (0, 0)),
                pl.BlockSpec((1, D_OUT_PAD), lambda i: (0, 0)),
            ],
            out_specs=pl.BlockSpec((tm, D_OUT_PAD), lambda i: (i, 0)),
        ),
        compiler_params=pltpu.CompilerParams(
            dimension_semantics=("parallel",)),
        cost_estimate=cost,
    )(x, w1p, b1p, w2p, b2p)

    return out[:B, :D_OUT]


def init_params(key):
    """Deterministic init mimicking torch.nn.Linear (uniform +-1/sqrt(fan_in))."""
    k1, k2, k3, k4 = jax.random.split(key, 4)
    lim1 = 1.0 / jnp.sqrt(784.0)
    lim2 = 1.0 / jnp.sqrt(128.0)
    w1 = jax.random.uniform(k1, (D_IN, HIDDEN), jnp.float32, -lim1, lim1)
    b1 = jax.random.uniform(k2, (1, HIDDEN), jnp.float32, -lim1, lim1)
    w2 = jax.random.uniform(k3, (HIDDEN, D_OUT), jnp.float32, -lim2, lim2)
    b2 = jax.random.uniform(k4, (1, D_OUT), jnp.float32, -lim2, lim2)
    return w1, b1, w2, b2


if __name__ == "__main__":
    key = jax.random.PRNGKey(0)
    kx, kp = jax.random.split(key)

    B = 8  # small demo batch (kernel pads rows up to one 128-row MXU tile)
    x = jax.random.normal(kx, (B, 1, 28, 28), jnp.float32)  # NCHW like torch
    w1, b1, w2, b2 = init_params(kp)

    out = seednet_forward(x, w1, b1, w2, b2)
    out = jax.block_until_ready(out)
    assert out.shape == (B, D_OUT)

    # f32 reference (same math as the PyTorch forward). Kernel uses bf16 MXU
    # operands with f32 accumulation, so use a correspondingly loose tolerance.
    xf = x.reshape(B, D_IN)
    ref = jnp.maximum(xf @ w1 + b1, 0.0) @ w2 + b2
    assert jnp.allclose(out, ref, atol=5e-2, rtol=5e-2), (
        "max abs diff = %f" % float(jnp.max(jnp.abs(out - ref))))

    print("KERNEL_OK")
</pallas_src>

<mosaic_0001>
module attributes {stable_mosaic.version = 11 : i64} {
  func.func @seednet_kernel(%arg0: i32, %arg1: memref<128x896xbf16, #tpu.memory_space<vmem>>, %arg2: memref<896x128xbf16, #tpu.memory_space<vmem>>, %arg3: memref<1x128xf32, #tpu.memory_space<vmem>>, %arg4: memref<128x128xbf16, #tpu.memory_space<vmem>>, %arg5: memref<1x128xf32, #tpu.memory_space<vmem>>, %arg6: memref<128x128xf32, #tpu.memory_space<vmem>>) attributes {dimension_semantics = [#tpu.dimension_semantics<parallel>], iteration_bounds = array<i64: 1>, scalar_prefetch = 0 : i64, scratch_operands = 0 : i64, tpu.core_type = #tpu.core_type<tc>, window_params = [{transform_indices = @transform_0, window_bounds = array<i64: 128, 896>}, {pipeline_mode = #tpu.pipeline_mode<synchronous>, transform_indices = @transform_1, window_bounds = array<i64: 896, 128>}, {pipeline_mode = #tpu.pipeline_mode<synchronous>, transform_indices = @transform_2, window_bounds = array<i64: 1, 128>}, {pipeline_mode = #tpu.pipeline_mode<synchronous>, transform_indices = @transform_3, window_bounds = array<i64: 128, 128>}, {pipeline_mode = #tpu.pipeline_mode<synchronous>, transform_indices = @transform_4, window_bounds = array<i64: 1, 128>}, {transform_indices = @transform_5, window_bounds = array<i64: 128, 128>}]} {
    %c0 = arith.constant 0 : index
    %c0_0 = arith.constant 0 : index
    %0 = vector.load %arg1[%c0, %c0_0] : memref<128x896xbf16, #tpu.memory_space<vmem>>, vector<128x896xbf16>
    %c0_1 = arith.constant 0 : index
    %c0_2 = arith.constant 0 : index
    %1 = vector.load %arg2[%c0_1, %c0_2] : memref<896x128xbf16, #tpu.memory_space<vmem>>, vector<896x128xbf16>
    %cst = arith.constant dense<0.000000e+00> : vector<128x128xf32>
    %2 = tpu.matmul %0, %1, %cst {dimension_numbers = #tpu.dot_dimension_numbers<[1], [0], [0], [1], [0, 0, 1, 1], [], []>} : vector<128x896xbf16>, vector<896x128xbf16>, vector<128x128xf32> -> vector<128x128xf32>
    %c0_3 = arith.constant 0 : index
    %c0_4 = arith.constant 0 : index
    %3 = vector.load %arg3[%c0_3, %c0_4] : memref<1x128xf32, #tpu.memory_space<vmem>>, vector<1x128xf32>
    %4 = vector.broadcast %3 : vector<1x128xf32> to vector<128x128xf32>
    %5 = arith.addf %2, %4 : vector<128x128xf32>
    %cst_5 = arith.constant 0.000000e+00 : f32
    %6 = vector.broadcast %cst_5 : f32 to vector<128x128xf32>
    %7 = arith.maximumf %5, %6 : vector<128x128xf32>
    %8 = arith.truncf %7 : vector<128x128xf32> to vector<128x128xbf16>
    %c0_6 = arith.constant 0 : index
    %c0_7 = arith.constant 0 : index
    %9 = vector.load %arg4[%c0_6, %c0_7] : memref<128x128xbf16, #tpu.memory_space<vmem>>, vector<128x128xbf16>
    %cst_8 = arith.constant dense<0.000000e+00> : vector<128x128xf32>
    %10 = tpu.matmul %8, %9, %cst_8 {dimension_numbers = #tpu.dot_dimension_numbers<[1], [0], [0], [1], [0, 0, 1, 1], [], []>} : vector<128x128xbf16>, vector<128x128xbf16>, vector<128x128xf32> -> vector<128x128xf32>
    %c0_9 = arith.constant 0 : index
    %c0_10 = arith.constant 0 : index
    %11 = vector.load %arg5[%c0_9, %c0_10] : memref<1x128xf32, #tpu.memory_space<vmem>>, vector<1x128xf32>
    %12 = vector.broadcast %11 : vector<1x128xf32> to vector<128x128xf32>
    %13 = arith.addf %10, %12 : vector<128x128xf32>
    %c0_11 = arith.constant 0 : index
    %c0_12 = arith.constant 0 : index
    %14 = vector.load %arg6[%c0_11, %c0_12] : memref<128x128xf32, #tpu.memory_space<vmem>>, vector<128x128xf32>
    tpu.vector_store %arg6[%c0_11, %c0_12], %13 {strides = array<i32>} : memref<128x128xf32, #tpu.memory_space<vmem>>, vector<128x128xf32>,
    return
  }
  func.func @transform_0(%arg0: i32) -> (i32, i32) {
    %c0_i32 = arith.constant 0 : i32
    %c0_i32_0 = arith.constant 0 : i32
    return %arg0, %c0_i32 : i32, i32
  }
  func.func @transform_1(%arg0: i32) -> (i32, i32) {
    %c0_i32 = arith.constant 0 : i32
    %c0_i32_0 = arith.constant 0 : i32
    %c0_i32_1 = arith.constant 0 : i32
    return %c0_i32, %c0_i32_0 : i32, i32
  }
  func.func @transform_2(%arg0: i32) -> (i32, i32) {
    %c0_i32 = arith.constant 0 : i32
    %c0_i32_0 = arith.constant 0 : i32
    %c0_i32_1 = arith.constant 0 : i32
    return %c0_i32, %c0_i32_0 : i32, i32
  }
  func.func @transform_3(%arg0: i32) -> (i32, i32) {
    %c0_i32 = arith.constant 0 : i32
    %c0_i32_0 = arith.constant 0 : i32
    %c0_i32_1 = arith.constant 0 : i32
    return %c0_i32, %c0_i32_0 : i32, i32
  }
  func.func @transform_4(%arg0: i32) -> (i32, i32) {
    %c0_i32 = arith.constant 0 : i32
    %c0_i32_0 = arith.constant 0 : i32
    %c0_i32_1 = arith.constant 0 : i32
    return %c0_i32, %c0_i32_0 : i32, i32
  }
  func.func @transform_5(%arg0: i32) -> (i32, i32) {
    %c0_i32 = arith.constant 0 : i32
    %c0_i32_0 = arith.constant 0 : i32
    return %arg0, %c0_i32 : i32, i32
  }
}

</mosaic_0001>

<llo_original>
// kernel: tpu_custom_call.1
$region0: #{tpu_custom_call.1}
  #allocation0 [shape = 'u32[]', space=smem, size = 0x4, offset = 0x4, fixed_abs, tag = 'smem constant byte address 0x4 - core index']
  #allocation1 [shape = 'u32[144,128]{1,0:T(1,128)}', space=vmem, size = 0x12000, scoped, tag = 'internal scratch']
  %s0 = inlined_call_operand.hbm [shape: bf16[128,896], index: 0, kind: input, shape index: {}]
  %s1 = inlined_call_operand.hbm [shape: bf16[896,128], index: 1, kind: input, shape index: {}]
  %s2 = inlined_call_operand.vmem [shape: f32[1,128], index: 2, kind: input, shape index: {}]
  %s3 = inlined_call_operand.hbm [shape: bf16[128,128], index: 3, kind: input, shape index: {}]
  %s4 = inlined_call_operand.vmem [shape: f32[1,128], index: 4, kind: input, shape index: {}]
  %s5 = inlined_call_operand.hbm [shape: f32[128,128], index: 5, kind: output, shape index: {}]
  %s6 = sld [smem:[#allocation0]]
  $region42: #{tpu_custom_call.1} parent=0
    _
  %s8 = ssub.s32 1, %s6
  %s9 = scalar_select 0, %s8, %s6
  $region1: #{tpu_custom_call.1} parent=0
    #allocation2 [shape = 'u8[229376]{0}', space=vmem, size = 0x38000, scoped, tag = 'input window, operand 0, single buffered']
    #allocation3 [shape = 's32[1]{0}', space=sflag, size = 0x4, scoped, tag = 'scoped memory for tpu_custom_call.1']
    #allocation4 [shape = 's32[1]{0}', space=sflag, size = 0x4, scoped, tag = 'scoped memory for tpu_custom_call.1']
    #allocation5 [shape = 'u8[229376]{0}', space=vmem, size = 0x38000, scoped, tag = 'input window, operand 1, single buffered']
    #allocation6 [shape = 's32[1]{0}', space=sflag, size = 0x4, scoped, tag = 'scoped memory for tpu_custom_call.1']
    #allocation7 [shape = 'u8[32768]{0}', space=vmem, size = 0x8000, scoped, tag = 'input window, operand 3, single buffered']
    #allocation8 [shape = 'u8[65536]{0}', space=vmem, size = 0x10000, scoped, tag = 'output window, operand 0, single buffered']
    %10 = vsyncpa [#allocation3], 0
    %11 = vsyncpa [#allocation6], 0
    %12 = vsyncpa [#allocation4], 0
    // Predicated region
    $region2: #{tpu_custom_call.1} parent=1 // pred_check
      _
    $region3: #{tpu_custom_call.1} parent=1 // pred_check_branch
      %14 = sbr.rel (0) target = $region5
    $region4: #{tpu_custom_call.1} parent=1 // pred_region
      %s16 = ssub.s32 7168, 7168
      %17 = vsyncadd [#allocation3], %s16
      %s18 = sshll.u32 [#allocation2], 4
      %s19 = int_to_ptr.vmem [resolvable:$true] %s18
      %24 = dma.hbm_to_vmem [thread:$0]  %s0, 7168, %s19, [#allocation3], 448, 448, 28
    $region5: #{tpu_custom_call.1} parent=1 // pred_fallthru
      _
    // Predicated region
    $region6: #{tpu_custom_call.1} parent=1 // pred_check
      _
    $region7: #{tpu_custom_call.1} parent=1 // pred_check_branch
      %26 = sbr.rel (0) target = $region9
    $region8: #{tpu_custom_call.1} parent=1 // pred_region
      %s28 = ssub.s32 7168, 7168
      %29 = vsyncadd [#allocation6], %s28
      %s30 = sshll.u32 [#allocation5], 4
      %s31 = int_to_ptr.vmem [resolvable:$true] %s30
      %36 = dma.hbm_to_vmem [thread:$0]  %s1, 7168, %s31, [#allocation6], 64, 64, 4
    $region9: #{tpu_custom_call.1} parent=1 // pred_fallthru
      _
    // Predicated region
    $region10: #{tpu_custom_call.1} parent=1 // pred_check
      _
    $region11: #{tpu_custom_call.1} parent=1 // pred_check_branch
      %38 = sbr.rel (0) target = $region13
    $region12: #{tpu_custom_call.1} parent=1 // pred_region
      _
    $region13: #{tpu_custom_call.1} parent=1 // pred_fallthru
      _
    // Predicated region
    $region14: #{tpu_custom_call.1} parent=1 // pred_check
      _
    $region15: #{tpu_custom_call.1} parent=1 // pred_check_branch
      %40 = sbr.rel (0) target = $region17
    $region16: #{tpu_custom_call.1} parent=1 // pred_region
      %s42 = ssub.s32 1024, 1024
      %43 = vsyncadd [#allocation6], %s42
      %s44 = sshll.u32 [#allocation7], 4
      %s45 = int_to_ptr.vmem [resolvable:$true] %s44
      %50 = dma.hbm_to_vmem [thread:$0]  %s3, 1024, %s45, [#allocation6], 64, 64, 4
    $region17: #{tpu_custom_call.1} parent=1 // pred_fallthru
      _
    // Predicated region
    $region18: #{tpu_custom_call.1} parent=1 // pred_check
      _
    $region19: #{tpu_custom_call.1} parent=1 // pred_check_branch
      %52 = sbr.rel (0) target = $region21
    $region20: #{tpu_custom_call.1} parent=1 // pred_region
      _
    $region21: #{tpu_custom_call.1} parent=1 // pred_fallthru
      _
    // Predicated region
    $region22: #{tpu_custom_call.1} parent=1 // pred_check
      _
    $region23: #{tpu_custom_call.1} parent=1 // pred_check_branch
      %54 = sbr.rel (0) target = $region25
    $region24: #{tpu_custom_call.1} parent=1 // pred_region
      %55 = dma.done [#allocation3], 7168
    $region25: #{tpu_custom_call.1} parent=1 // pred_fallthru
      _
    // Predicated region
    $region26: #{tpu_custom_call.1} parent=1 // pred_check
      _
    $region27: #{tpu_custom_call.1} parent=1 // pred_check_branch
      %57 = sbr.rel (0) target = $region29
    $region28: #{tpu_custom_call.1} parent=1 // pred_region
      %58 = dma.done [#allocation6], 7168
    $region29: #{tpu_custom_call.1} parent=1 // pred_fallthru
      _
    // Predicated region
    $region30: #{tpu_custom_call.1} parent=1 // pred_check
      _
    $region31: #{tpu_custom_call.1} parent=1 // pred_check_branch
      %60 = sbr.rel (0) target = $region33
    $region32: #{tpu_custom_call.1} parent=1 // pred_region
      %61 = dma.done [#allocation6], 1024
    $region33: #{tpu_custom_call.1} parent=1 // pred_fallthru
      _
    %v63 = vld [vmem:[#allocation2] sm:$0xff]
    %v64 = vld [vmem:[#allocation2 + $0x8] sm:$0xff]
    %v65 = vld [vmem:[#allocation2 + $0x10] sm:$0xff]
    %v66 = vld [vmem:[#allocation2 + $0x18] sm:$0xf]
    %v67 = vld [vmem:[#allocation2 + $0x1c] sm:$0xff]
    %v68 = vld [vmem:[#allocation2 + $0x24] sm:$0xff]
    %v69 = vld [vmem:[#allocation2 + $0x2c] sm:$0xff]
    %v70 = vld [vmem:[#allocation2 + $0x34] sm:$0xf]
    %v71 = vld [vmem:[#allocation2 + $0x38] sm:$0xff]
    %v72 = vld [vmem:[#allocation2 + $0x40] sm:$0xff]
    %v73 = vld [vmem:[#allocation2 + $0x48] sm:$0xff]
    %v74 = vld [vmem:[#allocation2 + $0x50] sm:$0xf]
    %v75 = vld [vmem:[#allocation2 + $0x54] sm:$0xff]
    %v76 = vld [vmem:[#allocation2 + $0x5c] sm:$0xff]
    %v77 = vld [vmem:[#allocation2 + $0x64] sm:$0xff]
    %v78 = vld [vmem:[#allocation2 + $0x6c] sm:$0xf]
    %v79 = vld [vmem:[#allocation2 + $0x70] sm:$0xff]
    %v80 = vld [vmem:[#allocation2 + $0x78] sm:$0xff]
    %v81 = vld [vmem:[#allocation2 + $0x80] sm:$0xff]
    %v82 = vld [vmem:[#allocation2 + $0x88] sm:$0xf]
    %v83 = vld [vmem:[#allocation2 + $0x8c] sm:$0xff]
    %v84 = vld [vmem:[#allocation2 + $0x94] sm:$0xff]
    %v85 = vld [vmem:[#allocation2 + $0x9c] sm:$0xff]
    %v86 = vld [vmem:[#allocation2 + $0xa4] sm:$0xf]
    %v87 = vld [vmem:[#allocation2 + $0xa8] sm:$0xff]
    %v88 = vld [vmem:[#allocation2 + $0xb0] sm:$0xff]
    %v89 = vld [vmem:[#allocation2 + $0xb8] sm:$0xff]
    %v90 = vld [vmem:[#allocation2 + $0xc0] sm:$0xf]
    %v91 = vld [vmem:[#allocation2 + $0xc4] sm:$0xff]
    %v92 = vld [vmem:[#allocation2 + $0xcc] sm:$0xff]
    %v93 = vld [vmem:[#allocation2 + $0xd4] sm:$0xff]
    %v94 = vld [vmem:[#allocation2 + $0xdc] sm:$0xf]
    %v95 = vld [vmem:[#allocation2 + $0xe0] sm:$0xff]
    %v96 = vld [vmem:[#allocation2 + $0xe8] sm:$0xff]
    %v97 = vld [vmem:[#allocation2 + $0xf0] sm:$0xff]
    %v98 = vld [vmem:[#allocation2 + $0xf8] sm:$0xf]
    %v99 = vld [vmem:[#allocation2 + $0xfc] sm:$0xff]
    %v100 = vld [vmem:[#allocation2 + $0x104] sm:$0xff]
    %v101 = vld [vmem:[#allocation2 + $0x10c] sm:$0xff]
    %v102 = vld [vmem:[#allocation2 + $0x114] sm:$0xf]
    %v103 = vld [vmem:[#allocation2 + $0x118] sm:$0xff]
    %v104 = vld [vmem:[#allocation2 + $0x120] sm:$0xff]
    %v105 = vld [vmem:[#allocation2 + $0x128] sm:$0xff]
    %v106 = vld [vmem:[#allocation2 + $0x130] sm:$0xf]
    %v107 = vld [vmem:[#allocation2 + $0x134] sm:$0xff]
    %v108 = vld [vmem:[#allocation2 + $0x13c] sm:$0xff]
    %v109 = vld [vmem:[#allocation2 + $0x144] sm:$0xff]
    %v110 = vld [vmem:[#allocation2 + $0x14c] sm:$0xf]
    %v111 = vld [vmem:[#allocation2 + $0x150] sm:$0xff]
    %v112 = vld [vmem:[#allocation2 + $0x158] sm:$0xff]
    %v113 = vld [vmem:[#allocation2 + $0x160] sm:$0xff]
    %v114 = vld [vmem:[#allocation2 + $0x168] sm:$0xf]
    %v115 = vld [vmem:[#allocation2 + $0x16c] sm:$0xff]
    %v116 = vld [vmem:[#allocation2 + $0x174] sm:$0xff]
    %v117 = vld [vmem:[#allocation2 + $0x17c] sm:$0xff]
    %v118 = vld [vmem:[#allocation2 + $0x184] sm:$0xf]
    %v119 = vld [vmem:[#allocation2 + $0x188] sm:$0xff]
    %v120 = vld [vmem:[#allocation2 + $0x190] sm:$0xff]
    %v121 = vld [vmem:[#allocation2 + $0x198] sm:$0xff]
    %v122 = vld [vmem:[#allocation2 + $0x1a0] sm:$0xf]
    %v123 = vld [vmem:[#allocation2 + $0x1a4] sm:$0xff]
    %v124 = vld [vmem:[#allocation2 + $0x1ac] sm:$0xff]
    %v125 = vld [vmem:[#allocation2 + $0x1b4] sm:$0xff]
    %v126 = vld [vmem:[#allocation2 + $0x1bc] sm:$0xf]
    %v127 = vld [vmem:[#allocation5] sm:$0xf]
    %v128 = vld [vmem:[#allocation5 + $0x4] sm:$0xf]
    %v129 = vld [vmem:[#allocation5 + $0x8] sm:$0xf]
    %v130 = vld [vmem:[#allocation5 + $0xc] sm:$0xf]
    %v131 = vld [vmem:[#allocation5 + $0x10] sm:$0xf]
    %v132 = vld [vmem:[#allocation5 + $0x14] sm:$0xf]
    %v133 = vld [vmem:[#allocation5 + $0x18] sm:$0xf]
    %v134 = vld [vmem:[#allocation5 + $0x1c] sm:$0xf]
    %v135 = vld [vmem:[#allocation5 + $0x20] sm:$0xf]
    %v136 = vld [vmem:[#allocation5 + $0x24] sm:$0xf]
    %v137 = vld [vmem:[#allocation5 + $0x28] sm:$0xf]
    %v138 = vld [vmem:[#allocation5 + $0x2c] sm:$0xf]
    %v139 = vld [vmem:[#allocation5 + $0x30] sm:$0xf]
    %v140 = vld [vmem:[#allocation5 + $0x34] sm:$0xf]
    %v141 = vld [vmem:[#allocation5 + $0x38] sm:$0xf]
    %v142 = vld [vmem:[#allocation5 + $0x3c] sm:$0xf]
    %v143 = vld [vmem:[#allocation5 + $0x40] sm:$0xf]
    %v144 = vld [vmem:[#allocation5 + $0x44] sm:$0xf]
    %v145 = vld [vmem:[#allocation5 + $0x48] sm:$0xf]
    %v146 = vld [vmem:[#allocation5 + $0x4c] sm:$0xf]
    %v147 = vld [vmem:[#allocation5 + $0x50] sm:$0xf]
    %v148 = vld [vmem:[#allocation5 + $0x54] sm:$0xf]
    %v149 = vld [vmem:[#allocation5 + $0x58] sm:$0xf]
    %v150 = vld [vmem:[#allocation5 + $0x5c] sm:$0xf]
    %v151 = vld [vmem:[#allocation5 + $0x60] sm:$0xf]
    %v152 = vld [vmem:[#allocation5 + $0x64] sm:$0xf]
    %v153 = vld [vmem:[#allocation5 + $0x68] sm:$0xf]
    %v154 = vld [vmem:[#allocation5 + $0x6c] sm:$0xf]
    %v155 = vld [vmem:[#allocation5 + $0x70] sm:$0xf]
    %v156 = vld [vmem:[#allocation5 + $0x74] sm:$0xf]
    %v157 = vld [vmem:[#allocation5 + $0x78] sm:$0xf]
    %v158 = vld [vmem:[#allocation5 + $0x7c] sm:$0xf]
    %v159 = vld [vmem:[#allocation5 + $0x80] sm:$0xf]
    %v160 = vld [vmem:[#allocation5 + $0x84] sm:$0xf]
    %v161 = vld [vmem:[#allocation5 + $0x88] sm:$0xf]
    %v162 = vld [vmem:[#allocation5 + $0x8c] sm:$0xf]
    %v163 = vld [vmem:[#allocation5 + $0x90] sm:$0xf]
    %v164 = vld [vmem:[#allocation5 + $0x94] sm:$0xf]
    %v165 = vld [vmem:[#allocation5 + $0x98] sm:$0xf]
    %v166 = vld [vmem:[#allocation5 + $0x9c] sm:$0xf]
    %v167 = vld [vmem:[#allocation5 + $0xa0] sm:$0xf]
    %v168 = vld [vmem:[#allocation5 + $0xa4] sm:$0xf]
    %v169 = vld [vmem:[#allocation5 + $0xa8] sm:$0xf]
    %v170 = vld [vmem:[#allocation5 + $0xac] sm:$0xf]
    %v171 = vld [vmem:[#allocation5 + $0xb0] sm:$0xf]
    %v172 = vld [vmem:[#allocation5 + $0xb4] sm:$0xf]
    %v173 = vld [vmem:[#allocation5 + $0xb8] sm:$0xf]
    %v174 = vld [vmem:[#allocation5 + $0xbc] sm:$0xf]
    %v175 = vld [vmem:[#allocation5 + $0xc0] sm:$0xf]
    %v176 = vld [vmem:[#allocation5 + $0xc4] sm:$0xf]
    %v177 = vld [vmem:[#allocation5 + $0xc8] sm:$0xf]
    %v178 = vld [vmem:[#allocation5 + $0xcc] sm:$0xf]
    %v179 = vld [vmem:[#allocation5 + $0xd0] sm:$0xf]
    %v180 = vld [vmem:[#allocation5 + $0xd4] sm:$0xf]
    %v181 = vld [vmem:[#allocation5 + $0xd8] sm:$0xf]
    %v182 = vld [vmem:[#allocation5 + $0xdc] sm:$0xf]
    %v183 = vld [vmem:[#allocation5 + $0xe0] sm:$0xf]
    %v184 = vld [vmem:[#allocation5 + $0xe4] sm:$0xf]
    %v185 = vld [vmem:[#allocation5 + $0xe8] sm:$0xf]
    %v186 = vld [vmem:[#allocation5 + $0xec] sm:$0xf]
    %v187 = vld [vmem:[#allocation5 + $0xf0] sm:$0xf]
    %v188 = vld [vmem:[#allocation5 + $0xf4] sm:$0xf]
    %v189 = vld [vmem:[#allocation5 + $0xf8] sm:$0xf]
    %v190 = vld [vmem:[#allocation5 + $0xfc] sm:$0xf]
    %v191 = vld [vmem:[#allocation5 + $0x100] sm:$0xf]
    %v192 = vld [vmem:[#allocation5 + $0x104] sm:$0xf]
    %v193 = vld [vmem:[#allocation5 + $0x108] sm:$0xf]
    %v194 = vld [vmem:[#allocation5 + $0x10c] sm:$0xf]
    %v195 = vld [vmem:[#allocation5 + $0x110] sm:$0xf]
    %v196 = vld [vmem:[#allocation5 + $0x114] sm:$0xf]
    %v197 = vld [vmem:[#allocation5 + $0x118] sm:$0xf]
    %v198 = vld [vmem:[#allocation5 + $0x11c] sm:$0xf]
    %v199 = vld [vmem:[#allocation5 + $0x120] sm:$0xf]
    %v200 = vld [vmem:[#allocation5 + $0x124] sm:$0xf]
    %v201 = vld [vmem:[#allocation5 + $0x128] sm:$0xf]
    %v202 = vld [vmem:[#allocation5 + $0x12c] sm:$0xf]
    %v203 = vld [vmem:[#allocation5 + $0x130] sm:$0xf]
    %v204 = vld [vmem:[#allocation5 + $0x134] sm:$0xf]
    %v205 = vld [vmem:[#allocation5 + $0x138] sm:$0xf]
    %v206 = vld [vmem:[#allocation5 + $0x13c] sm:$0xf]
    %v207 = vld [vmem:[#allocation5 + $0x140] sm:$0xf]
    %v208 = vld [vmem:[#allocation5 + $0x144] sm:$0xf]
    %v209 = vld [vmem:[#allocation5 + $0x148] sm:$0xf]
    %v210 = vld [vmem:[#allocation5 + $0x14c] sm:$0xf]
    %v211 = vld [vmem:[#allocation5 + $0x150] sm:$0xf]
    %v212 = vld [vmem:[#allocation5 + $0x154] sm:$0xf]
    %v213 = vld [vmem:[#allocation5 + $0x158] sm:$0xf]
    %v214 = vld [vmem:[#allocation5 + $0x15c] sm:$0xf]
    %v215 = vld [vmem:[#allocation5 + $0x160] sm:$0xf]
    %v216 = vld [vmem:[#allocation5 + $0x164] sm:$0xf]
    %v217 = vld [vmem:[#allocation5 + $0x168] sm:$0xf]
    %v218 = vld [vmem:[#allocation5 + $0x16c] sm:$0xf]
    %v219 = vld [vmem:[#allocation5 + $0x170] sm:$0xf]
    %v220 = vld [vmem:[#allocation5 + $0x174] sm:$0xf]
    %v221 = vld [vmem:[#allocation5 + $0x178] sm:$0xf]
    %v222 = vld [vmem:[#allocation5 + $0x17c] sm:$0xf]
    %v223 = vld [vmem:[#allocation5 + $0x180] sm:$0xf]
    %v224 = vld [vmem:[#allocation5 + $0x184] sm:$0xf]
    %v225 = vld [vmem:[#allocation5 + $0x188] sm:$0xf]
    %v226 = vld [vmem:[#allocation5 + $0x18c] sm:$0xf]
    %v227 = vld [vmem:[#allocation5 + $0x190] sm:$0xf]
    %v228 = vld [vmem:[#allocation5 + $0x194] sm:$0xf]
    %v229 = vld [vmem:[#allocation5 + $0x198] sm:$0xf]
    %v230 = vld [vmem:[#allocation5 + $0x19c] sm:$0xf]
    %v231 = vld [vmem:[#allocation5 + $0x1a0] sm:$0xf]
    %v232 = vld [vmem:[#allocation5 + $0x1a4] sm:$0xf]
    %v233 = vld [vmem:[#allocation5 + $0x1a8] sm:$0xf]
    %v234 = vld [vmem:[#allocation5 + $0x1ac] sm:$0xf]
    %v235 = vld [vmem:[#allocation5 + $0x1b0] sm:$0xf]
    %v236 = vld [vmem:[#allocation5 + $0x1b4] sm:$0xf]
    %v237 = vld [vmem:[#allocation5 + $0x1b8] sm:$0xf]
    %v238 = vld [vmem:[#allocation5 + $0x1bc] sm:$0xf]
    %v239 = vld [vmem:[%s2] sm:$0x1]
    %v241 = vlaneseq
    %v242 = vshrl.u32 %v241, 7
    %v243 = vsub.s32 0, %v242
    %v244 = vrot.slane %v239, %v243
    %v310 = vunpack.c.l.b16 %v63
    %v311 = vunpack.c.h.b16 %v63
    %v312 = vunpack.c.l.b16 %v64
    %v313 = vunpack.c.h.b16 %v64
    %v314 = vunpack.c.l.b16 %v65
    %v315 = vunpack.c.h.b16 %v65
    %v316 = vunpack.c.l.b16 %v66
    %v317 = vunpack.c.l.b16 %v67
    %v318 = vunpack.c.h.b16 %v67
    %v319 = vunpack.c.l.b16 %v68
    %v320 = vunpack.c.h.b16 %v68
    %v321 = vunpack.c.l.b16 %v69
    %v322 = vunpack.c.h.b16 %v69
    %v323 = vunpack.c.l.b16 %v70
    %v324 = vunpack.c.l.b16 %v71
    %v325 = vunpack.c.h.b16 %v71
    %v326 = vunpack.c.l.b16 %v72
    %v327 = vunpack.c.h.b16 %v72
    %v328 = vunpack.c.l.b16 %v73
    %v329 = vunpack.c.h.b16 %v73
    %v330 = vunpack.c.l.b16 %v74
    %v331 = vunpack.c.l.b16 %v75
    %v332 = vunpack.c.h.b16 %v75
    %v333 = vunpack.c.l.b16 %v76
    %v334 = vunpack.c.h.b16 %v76
    %v335 = vunpack.c.l.b16 %v77
    %v336 = vunpack.c.h.b16 %v77
    %v337 = vunpack.c.l.b16 %v78
    %v338 = vunpack.c.l.b16 %v79
    %v339 = vunpack.c.h.b16 %v79
    %v340 = vunpack.c.l.b16 %v80
    %v341 = vunpack.c.h.b16 %v80
    %v342 = vunpack.c.l.b16 %v81
    %v343 = vunpack.c.h.b16 %v81
    %v344 = vunpack.c.l.b16 %v82
    %v345 = vunpack.c.l.b16 %v83
    %v346 = vunpack.c.h.b16 %v83
    %v347 = vunpack.c.l.b16 %v84
    %v348 = vunpack.c.h.b16 %v84
    %v349 = vunpack.c.l.b16 %v85
    %v350 = vunpack.c.h.b16 %v85
    %v351 = vunpack.c.l.b16 %v86
    %v352 = vunpack.c.l.b16 %v87
    %v353 = vunpack.c.h.b16 %v87
    %v354 = vunpack.c.l.b16 %v88
    %v355 = vunpack.c.h.b16 %v88
    %v356 = vunpack.c.l.b16 %v89
    %v357 = vunpack.c.h.b16 %v89
    %v358 = vunpack.c.l.b16 %v90
    %v359 = vunpack.c.l.b16 %v91
    %v360 = vunpack.c.h.b16 %v91
    %v361 = vunpack.c.l.b16 %v92
    %v362 = vunpack.c.h.b16 %v92
    %v363 = vunpack.c.l.b16 %v93
    %v364 = vunpack.c.h.b16 %v93
    %v365 = vunpack.c.l.b16 %v94
    %v366 = vunpack.c.l.b16 %v95
    %v367 = vunpack.c.h.b16 %v95
    %v368 = vunpack.c.l.b16 %v96
    %v369 = vunpack.c.h.b16 %v96
    %v370 = vunpack.c.l.b16 %v97
    %v371 = vunpack.c.h.b16 %v97
    %v372 = vunpack.c.l.b16 %v98
    %v373 = vunpack.c.l.b16 %v99
    %v374 = vunpack.c.h.b16 %v99
    %v375 = vunpack.c.l.b16 %v100
    %v376 = vunpack.c.h.b16 %v100
    %v377 = vunpack.c.l.b16 %v101
    %v378 = vunpack.c.h.b16 %v101
    %v379 = vunpack.c.l.b16 %v102
    %v380 = vunpack.c.l.b16 %v103
    %v381 = vunpack.c.h.b16 %v103
    %v382 = vunpack.c.l.b16 %v104
    %v383 = vunpack.c.h.b16 %v104
    %v384 = vunpack.c.l.b16 %v105
    %v385 = vunpack.c.h.b16 %v105
    %v386 = vunpack.c.l.b16 %v106
    %v387 = vunpack.c.l.b16 %v107
    %v388 = vunpack.c.h.b16 %v107
    %v389 = vunpack.c.l.b16 %v108
    %v390 = vunpack.c.h.b16 %v108
    %v391 = vunpack.c.l.b16 %v109
    %v392 = vunpack.c.h.b16 %v109
    %v393 = vunpack.c.l.b16 %v110
    %v394 = vunpack.c.l.b16 %v111
    %v395 = vunpack.c.h.b16 %v111
    %v396 = vunpack.c.l.b16 %v112
    %v397 = vunpack.c.h.b16 %v112
    %v398 = vunpack.c.l.b16 %v113
    %v399 = vunpack.c.h.b16 %v113
    %v400 = vunpack.c.l.b16 %v114
    %v401 = vunpack.c.l.b16 %v115
    %v402 = vunpack.c.h.b16 %v115
    %v403 = vunpack.c.l.b16 %v116
    %v404 = vunpack.c.h.b16 %v116
    %v405 = vunpack.c.l.b16 %v117
    %v406 = vunpack.c.h.b16 %v117
    %v407 = vunpack.c.l.b16 %v118
    %v408 = vunpack.c.l.b16 %v119
    %v409 = vunpack.c.h.b16 %v119
    %v410 = vunpack.c.l.b16 %v120
    %v411 = vunpack.c.h.b16 %v120
    %v412 = vunpack.c.l.b16 %v121
    %v413 = vunpack.c.h.b16 %v121
    %v414 = vunpack.c.l.b16 %v122
    %v415 = vunpack.c.l.b16 %v123
    %v416 = vunpack.c.h.b16 %v123
    %v417 = vunpack.c.l.b16 %v124
    %v418 = vunpack.c.h.b16 %v124
    %v419 = vunpack.c.l.b16 %v125
    %v420 = vunpack.c.h.b16 %v125
    %v421 = vunpack.c.l.b16 %v126
    %v422 = vpack.c.b16 %v317, %v310
    %v423 = vpack.c.b16 %v318, %v311
    %v424 = vpack.c.b16 %v319, %v312
    %v425 = vpack.c.b16 %v320, %v313
    %v426 = vpack.c.b16 %v321, %v314
    %v427 = vpack.c.b16 %v322, %v315
    %v428 = vpack.c.b16 %v323, %v316
    %v429 = vpack.c.b16 %v331, %v324
    %v430 = vpack.c.b16 %v332, %v325
    %v431 = vpack.c.b16 %v333, %v326
    %v432 = vpack.c.b16 %v334, %v327
    %v433 = vpack.c.b16 %v335, %v328
    %v434 = vpack.c.b16 %v336, %v329
    %v435 = vpack.c.b16 %v337, %v330
    %v436 = vpack.c.b16 %v345, %v338
    %v437 = vpack.c.b16 %v346, %v339
    %v438 = vpack.c.b16 %v347, %v340
    %v439 = vpack.c.b16 %v348, %v341
    %v440 = vpack.c.b16 %v349, %v342
    %v441 = vpack.c.b16 %v350, %v343
    %v442 = vpack.c.b16 %v351, %v344
    %v443 = vpack.c.b16 %v359, %v352
    %v444 = vpack.c.b16 %v360, %v353
    %v445 = vpack.c.b16 %v361, %v354
    %v446 = vpack.c.b16 %v362, %v355
    %v447 = vpack.c.b16 %v363, %v356
    %v448 = vpack.c.b16 %v364, %v357
    %v449 = vpack.c.b16 %v365, %v358
    %v450 = vpack.c.b16 %v373, %v366
    %v451 = vpack.c.b16 %v374, %v367
    %v452 = vpack.c.b16 %v375, %v368
    %v453 = vpack.c.b16 %v376, %v369
    %v454 = vpack.c.b16 %v377, %v370
    %v455 = vpack.c.b16 %v378, %v371
    %v456 = vpack.c.b16 %v379, %v372
    %v457 = vpack.c.b16 %v387, %v380
    %v458 = vpack.c.b16 %v388, %v381
    %v459 = vpack.c.b16 %v389, %v382
    %v460 = vpack.c.b16 %v390, %v383
    %v461 = vpack.c.b16 %v391, %v384
    %v462 = vpack.c.b16 %v392, %v385
    %v463 = vpack.c.b16 %v393, %v386
    %v464 = vpack.c.b16 %v401, %v394
    %v465 = vpack.c.b16 %v402, %v395
    %v466 = vpack.c.b16 %v403, %v396
    %v467 = vpack.c.b16 %v404, %v397
    %v468 = vpack.c.b16 %v405, %v398
    %v469 = vpack.c.b16 %v406, %v399
    %v470 = vpack.c.b16 %v407, %v400
    %v471 = vpack.c.b16 %v415, %v408
    %v472 = vpack.c.b16 %v416, %v409
    %v473 = vpack.c.b16 %v417, %v410
    %v474 = vpack.c.b16 %v418, %v411
    %v475 = vpack.c.b16 %v419, %v412
    %v476 = vpack.c.b16 %v420, %v413
    %v477 = vpack.c.b16 %v421, %v414
    %v646 = vunpack.c.l.b16 %v127
    %v647 = vunpack.c.l.b16 %v128
    %v648 = vunpack.c.l.b16 %v129
    %v649 = vunpack.c.l.b16 %v130
    %v650 = vunpack.c.l.b16 %v131
    %v651 = vunpack.c.l.b16 %v132
    %v652 = vunpack.c.l.b16 %v133
    %v653 = vunpack.c.l.b16 %v134
    %v654 = vunpack.c.l.b16 %v135
    %v655 = vunpack.c.l.b16 %v136
    %v656 = vunpack.c.l.b16 %v137
    %v657 = vunpack.c.l.b16 %v138
    %v658 = vunpack.c.l.b16 %v139
    %v659 = vunpack.c.l.b16 %v140
    %v660 = vunpack.c.l.b16 %v141
    %v661 = vunpack.c.l.b16 %v142
    %v662 = vunpack.c.l.b16 %v143
    %v663 = vunpack.c.l.b16 %v144
    %v664 = vunpack.c.l.b16 %v145
    %v665 = vunpack.c.l.b16 %v146
    %v666 = vunpack.c.l.b16 %v147
    %v667 = vunpack.c.l.b16 %v148
    %v668 = vunpack.c.l.b16 %v149
    %v669 = vunpack.c.l.b16 %v150
    %v670 = vunpack.c.l.b16 %v151
    %v671 = vunpack.c.l.b16 %v152
    %v672 = vunpack.c.l.b16 %v153
    %v673 = vunpack.c.l.b16 %v154
    %v674 = vunpack.c.l.b16 %v155
    %v675 = vunpack.c.l.b16 %v156
    %v676 = vunpack.c.l.b16 %v157
    %v677 = vunpack.c.l.b16 %v158
    %v678 = vunpack.c.l.b16 %v159
    %v679 = vunpack.c.l.b16 %v160
    %v680 = vunpack.c.l.b16 %v161
    %v681 = vunpack.c.l.b16 %v162
    %v682 = vunpack.c.l.b16 %v163
    %v683 = vunpack.c.l.b16 %v164
    %v684 = vunpack.c.l.b16 %v165
    %v685 = vunpack.c.l.b16 %v166
    %v686 = vunpack.c.l.b16 %v167
    %v687 = vunpack.c.l.b16 %v168
    %v688 = vunpack.c.l.b16 %v169
    %v689 = vunpack.c.l.b16 %v170
    %v690 = vunpack.c.l.b16 %v171
    %v691 = vunpack.c.l.b16 %v172
    %v692 = vunpack.c.l.b16 %v173
    %v693 = vunpack.c.l.b16 %v174
    %v694 = vunpack.c.l.b16 %v175
    %v695 = vunpack.c.l.b16 %v176
    %v696 = vunpack.c.l.b16 %v177
    %v697 = vunpack.c.l.b16 %v178
    %v698 = vunpack.c.l.b16 %v179
    %v699 = vunpack.c.l.b16 %v180
    %v700 = vunpack.c.l.b16 %v181
    %v701 = vunpack.c.l.b16 %v182
    %v702 = vunpack.c.l.b16 %v183
    %v703 = vunpack.c.l.b16 %v184
    %v704 = vunpack.c.l.b16 %v185
    %v705 = vunpack.c.l.b16 %v186
    %v706 = vunpack.c.l.b16 %v187
    %v707 = vunpack.c.l.b16 %v188
    %v708 = vunpack.c.l.b16 %v189
    %v709 = vunpack.c.l.b16 %v190
    %v710 = vunpack.c.l.b16 %v191
    %v711 = vunpack.c.l.b16 %v192
    %v712 = vunpack.c.l.b16 %v193
    %v713 = vunpack.c.l.b16 %v194
    %v714 = vunpack.c.l.b16 %v195
    %v715 = vunpack.c.l.b16 %v196
    %v716 = vunpack.c.l.b16 %v197
    %v717 = vunpack.c.l.b16 %v198
    %v718 = vunpack.c.l.b16 %v199
    %v719 = vunpack.c.l.b16 %v200
    %v720 = vunpack.c.l.b16 %v201
    %v721 = vunpack.c.l.b16 %v202
    %v722 = vunpack.c.l.b16 %v203
    %v723 = vunpack.c.l.b16 %v204
    %v724 = vunpack.c.l.b16 %v205
    %v725 = vunpack.c.l.b16 %v206
    %v726 = vunpack.c.l.b16 %v207
    %v727 = vunpack.c.l.b16 %v208
    %v728 = vunpack.c.l.b16 %v209
    %v729 = vunpack.c.l.b16 %v210
    %v730 = vunpack.c.l.b16 %v211
    %v731 = vunpack.c.l.b16 %v212
    %v732 = vunpack.c.l.b16 %v213
    %v733 = vunpack.c.l.b16 %v214
    %v734 = vunpack.c.l.b16 %v215
    %v735 = vunpack.c.l.b16 %v216
    %v736 = vunpack.c.l.b16 %v217
    %v737 = vunpack.c.l.b16 %v218
    %v738 = vunpack.c.l.b16 %v219
    %v739 = vunpack.c.l.b16 %v220
    %v740 = vunpack.c.l.b16 %v221
    %v741 = vunpack.c.l.b16 %v222
    %v742 = vunpack.c.l.b16 %v223
    %v743 = vunpack.c.l.b16 %v224
    %v744 = vunpack.c.l.b16 %v225
    %v745 = vunpack.c.l.b16 %v226
    %v746 = vunpack.c.l.b16 %v227
    %v747 = vunpack.c.l.b16 %v228
    %v748 = vunpack.c.l.b16 %v229
    %v749 = vunpack.c.l.b16 %v230
    %v750 = vunpack.c.l.b16 %v231
    %v751 = vunpack.c.l.b16 %v232
    %v752 = vunpack.c.l.b16 %v233
    %v753 = vunpack.c.l.b16 %v234
    %v754 = vunpack.c.l.b16 %v235
    %v755 = vunpack.c.l.b16 %v236
    %v756 = vunpack.c.l.b16 %v237
    %v757 = vunpack.c.l.b16 %v238
    %v758 = vpack.c.b16 %v647, %v646
    %v759 = vpack.c.b16 %v649, %v648
    %v760 = vpack.c.b16 %v651, %v650
    %v761 = vpack.c.b16 %v653, %v652
    %v762 = vpack.c.b16 %v655, %v654
    %v763 = vpack.c.b16 %v657, %v656
    %v764 = vpack.c.b16 %v659, %v658
    %v765 = vpack.c.b16 %v661, %v660
    %v766 = vpack.c.b16 %v663, %v662
    %v767 = vpack.c.b16 %v665, %v664
    %v768 = vpack.c.b16 %v667, %v666
    %v769 = vpack.c.b16 %v669, %v668
    %v770 = vpack.c.b16 %v671, %v670
    %v771 = vpack.c.b16 %v673, %v672
    %v772 = vpack.c.b16 %v675, %v674
    %v773 = vpack.c.b16 %v677, %v676
    %v774 = vpack.c.b16 %v679, %v678
    %v775 = vpack.c.b16 %v681, %v680
    %v776 = vpack.c.b16 %v683, %v682
    %v777 = vpack.c.b16 %v685, %v684
    %v778 = vpack.c.b16 %v687, %v686
    %v779 = vpack.c.b16 %v689, %v688
    %v780 = vpack.c.b16 %v691, %v690
    %v781 = vpack.c.b16 %v693, %v692
    %v782 = vpack.c.b16 %v695, %v694
    %v783 = vpack.c.b16 %v697, %v696
    %v784 = vpack.c.b16 %v699, %v698
    %v785 = vpack.c.b16 %v701, %v700
    %v786 = vpack.c.b16 %v703, %v702
    %v787 = vpack.c.b16 %v705, %v704
    %v788 = vpack.c.b16 %v707, %v706
    %v789 = vpack.c.b16 %v709, %v708
    %v790 = vpack.c.b16 %v711, %v710
    %v791 = vpack.c.b16 %v713, %v712
    %v792 = vpack.c.b16 %v715, %v714
    %v793 = vpack.c.b16 %v717, %v716
    %v794 = vpack.c.b16 %v719, %v718
    %v795 = vpack.c.b16 %v721, %v720
    %v796 = vpack.c.b16 %v723, %v722
    %v797 = vpack.c.b16 %v725, %v724
    %v798 = vpack.c.b16 %v727, %v726
    %v799 = vpack.c.b16 %v729, %v728
    %v800 = vpack.c.b16 %v731, %v730
    %v801 = vpack.c.b16 %v733, %v732
    %v802 = vpack.c.b16 %v735, %v734
    %v803 = vpack.c.b16 %v737, %v736
    %v804 = vpack.c.b16 %v739, %v738
    %v805 = vpack.c.b16 %v741, %v740
    %v806 = vpack.c.b16 %v743, %v742
    %v807 = vpack.c.b16 %v745, %v744
    %v808 = vpack.c.b16 %v747, %v746
    %v809 = vpack.c.b16 %v749, %v748
    %v810 = vpack.c.b16 %v751, %v750
    %v811 = vpack.c.b16 %v753, %v752
    %v812 = vpack.c.b16 %v755, %v754
    %v813 = vpack.c.b16 %v757, %v756
    %870 = vmatprep.subr.bf16.mxu0 0
    %871 = vmatpush1.bf16.msra.mxu0 %v765
    %872 = vmatprep.subr.bf16.mxu0 0
    %873 = vmatpush1.bf16.msra.mxu0 %v764
    %874 = vmatprep.subr.bf16.mxu0 0
    %875 = vmatpush1.bf16.msra.mxu0 %v763
    %876 = vmatprep.subr.bf16.mxu0 0
    %877 = vmatpush1.bf16.msra.mxu0 %v762
    %878 = vmatprep.subr.bf16.mxu0 0
    %879 = vmatpush1.bf16.msra.mxu0 %v761
    %880 = vmatprep.subr.bf16.mxu0 0
    %881 = vmatpush1.bf16.msra.mxu0 %v760
    %882 = vmatprep.subr.bf16.mxu0 0
    %883 = vmatpush1.bf16.msra.mxu0 %v759
    %884 = vmatprep.subr.bf16.mxu0 0
    %885 = vmatpush1.bf16.msra.mxu0 %v758
    %886 = vmatprep.subr.bf16.mxu0 0
    %887 = vmatpush2.bf16.msra.mxu0 %v773
    %888 = vmatprep.subr.bf16.mxu0 0
    %889 = vmatpush2.bf16.msra.mxu0 %v772
    %890 = vmatprep.subr.bf16.mxu0 0
    %891 = vmatpush2.bf16.msra.mxu0 %v771
    %892 = vmatprep.subr.bf16.mxu0 0
    %893 = vmatpush2.bf16.msra.mxu0 %v770
    %894 = vmatprep.subr.bf16.mxu0 0
    %895 = vmatpush2.bf16.msra.mxu0 %v769
    %896 = vmatprep.subr.bf16.mxu0 0
    %897 = vmatpush2.bf16.msra.mxu0 %v768
    %898 = vmatprep.subr.bf16.mxu0 0
    %899 = vmatpush2.bf16.msra.mxu0 %v767
    %900 = vmatprep.subr.bf16.mxu0 0
    %901 = vmatpush2.bf16.msra.mxu0 %v766
    %902 = vmatprep.mubr.bf16.mxu0 %v423
    %903 = vmatmul.mubr.bf16.gmra.mxu0 %v422
    %v904 = vpop.f32.mrf.mxu0
    %v905 = vadd.f32 %v244, %v904
    %v906 = vpop.f32.mrf.mxu0
    %v907 = vpop.f32.mrf.mxu0
    %v908 = vadd.f32 %v244, %v907
    %v909 = vpop.f32.mrf.mxu0
    %910 = vmatprep.mubr.bf16.mxu0 %v430
    %911 = vmatmul.mubr.bf16.gmra.mxu0 %v429
    %v912 = vpop.f32.mrf.mxu0
    %v913 = vadd.f32 %v244, %v912
    %v914 = vpop.f32.mrf.mxu0
    %v915 = vpop.f32.mrf.mxu0
    %v916 = vadd.f32 %v244, %v915
    %v917 = vpop.f32.mrf.mxu0
    %918 = vmatprep.mubr.bf16.mxu0 %v437
    %919 = vmatmul.mubr.bf16.gmra.mxu0 %v436
    %v920 = vpop.f32.mrf.mxu0
    %v921 = vadd.f32 %v244, %v920
    %v922 = vpop.f32.mrf.mxu0
    %v923 = vpop.f32.mrf.mxu0
    %v924 = vadd.f32 %v244, %v923
    %v925 = vpop.f32.mrf.mxu0
    %926 = vmatprep.mubr.bf16.mxu0 %v444
    %927 = vmatmul.mubr.bf16.gmra.mxu0 %v443
    %v928 = vpop.f32.mrf.mxu0
    %v929 = vadd.f32 %v244, %v928
    %v930 = vpop.f32.mrf.mxu0
    %v931 = vpop.f32.mrf.mxu0
    %v932 = vadd.f32 %v244, %v931
    %v933 = vpop.f32.mrf.mxu0
    %934 = vmatprep.mubr.bf16.mxu0 %v451
    %935 = vmatmul.mubr.bf16.gmra.mxu0 %v450
    %v936 = vpop.f32.mrf.mxu0
    %v937 = vadd.f32 %v244, %v936
    %v938 = vpop.f32.mrf.mxu0
    %v939 = vpop.f32.mrf.mxu0
    %v940 = vadd.f32 %v244, %v939
    %v941 = vpop.f32.mrf.mxu0
    %942 = vmatprep.mubr.bf16.mxu0 %v458
    %943 = vmatmul.mubr.bf16.gmra.mxu0 %v457
    %v944 = vpop.f32.mrf.mxu0
    %v945 = vadd.f32 %v244, %v944
    %v946 = vpop.f32.mrf.mxu0
    %v947 = vpop.f32.mrf.mxu0
    %v948 = vadd.f32 %v244, %v947
    %v949 = vpop.f32.mrf.mxu0
    %950 = vmatprep.mubr.bf16.mxu0 %v465
    %951 = vmatmul.mubr.bf16.gmra.mxu0 %v464
    %v952 = vpop.f32.mrf.mxu0
    %v953 = vadd.f32 %v244, %v952
    %v954 = vpop.f32.mrf.mxu0
    %v955 = vpop.f32.mrf.mxu0
    %v956 = vadd.f32 %v244, %v955
    %v957 = vpop.f32.mrf.mxu0
    %958 = vmatprep.mubr.bf16.mxu0 %v472
    %959 = vmatmul.mubr.bf16.gmra.mxu0 %v471
    %v960 = vpop.f32.mrf.mxu0
    %v961 = vadd.f32 %v244, %v960
    %v962 = vpop.f32.mrf.mxu0
    %v963 = vpop.f32.mrf.mxu0
    %v964 = vadd.f32 %v244, %v963
    %v965 = vpop.f32.mrf.mxu0
    %966 = vdwg.mxu0
    %967 = vmatprep.subr.bf16.mxu0 0
    %968 = vmatpush1.bf16.msra.mxu0 %v781
    %969 = vmatprep.subr.bf16.mxu0 0
    %970 = vmatpush1.bf16.msra.mxu0 %v780
    %971 = vmatprep.subr.bf16.mxu0 0
    %972 = vmatpush1.bf16.msra.mxu0 %v779
    %973 = vmatprep.subr.bf16.mxu0 0
    %974 = vmatpush1.bf16.msra.mxu0 %v778
    %975 = vmatprep.subr.bf16.mxu0 0
    %976 = vmatpush1.bf16.msra.mxu0 %v777
    %977 = vmatprep.subr.bf16.mxu0 0
    %978 = vmatpush1.bf16.msra.mxu0 %v776
    %979 = vmatprep.subr.bf16.mxu0 0
    %980 = vmatpush1.bf16.msra.mxu0 %v775
    %981 = vmatprep.subr.bf16.mxu0 0
    %982 = vmatpush1.bf16.msra.mxu0 %v774
    %983 = vmatprep.subr.bf16.mxu0 0
    %984 = vmatpush2.bf16.msra.mxu0 %v789
    %985 = vmatprep.subr.bf16.mxu0 0
    %986 = vmatpush2.bf16.msra.mxu0 %v788
    %987 = vmatprep.subr.bf16.mxu0 0
    %988 = vmatpush2.bf16.msra.mxu0 %v787
    %989 = vmatprep.subr.bf16.mxu0 0
    %990 = vmatpush2.bf16.msra.mxu0 %v786
    %991 = vmatprep.subr.bf16.mxu0 0
    %992 = vmatpush2.bf16.msra.mxu0 %v785
    %993 = vmatprep.subr.bf16.mxu0 0
    %994 = vmatpush2.bf16.msra.mxu0 %v784
    %995 = vmatprep.subr.bf16.mxu0 0
    %996 = vmatpush2.bf16.msra.mxu0 %v783
    %997 = vmatprep.subr.bf16.mxu0 0
    %998 = vmatpush2.bf16.msra.mxu0 %v782
    %999 = vmatprep.mubr.bf16.mxu0 %v425
    %1000 = vmatmul.mubr.bf16.gmra.mxu0 %v424
    %v1001 = vpop.f32.mrf.mxu0
    %v1002 = vadd.f32 %v905, %v1001
    %v1003 = vpop.f32.mrf.mxu0
    %v1004 = vpop.f32.mrf.mxu0
    %v1005 = vadd.f32 %v908, %v1004
    %v1006 = vpop.f32.mrf.mxu0
    %1007 = vmatprep.mubr.bf16.mxu0 %v432
    %1008 = vmatmul.mubr.bf16.gmra.mxu0 %v431
    %v1009 = vpop.f32.mrf.mxu0
    %v1010 = vadd.f32 %v913, %v1009
    %v1011 = vpop.f32.mrf.mxu0
    %v1012 = vpop.f32.mrf.mxu0
    %v1013 = vadd.f32 %v916, %v1012
    %v1014 = vpop.f32.mrf.mxu0
    %1015 = vmatprep.mubr.bf16.mxu0 %v439
    %1016 = vmatmul.mubr.bf16.gmra.mxu0 %v438
    %v1017 = vpop.f32.mrf.mxu0
    %v1018 = vadd.f32 %v921, %v1017
    %v1019 = vpop.f32.mrf.mxu0
    %v1020 = vpop.f32.mrf.mxu0
    %v1021 = vadd.f32 %v924, %v1020
    %v1022 = vpop.f32.mrf.mxu0
    %1023 = vmatprep.mubr.bf16.mxu0 %v446
    %1024 = vmatmul.mubr.bf16.gmra.mxu0 %v445
    %v1025 = vpop.f32.mrf.mxu0
    %v1026 = vadd.f32 %v929, %v1025
    %v1027 = vpop.f32.mrf.mxu0
    %v1028 = vpop.f32.mrf.mxu0
    %v1029 = vadd.f32 %v932, %v1028
    %v1030 = vpop.f32.mrf.mxu0
    %1031 = vmatprep.mubr.bf16.mxu0 %v453
    %1032 = vmatmul.mubr.bf16.gmra.mxu0 %v452
    %v1033 = vpop.f32.mrf.mxu0
    %v1034 = vadd.f32 %v937, %v1033
    %v1035 = vpop.f32.mrf.mxu0
    %v1036 = vpop.f32.mrf.mxu0
    %v1037 = vadd.f32 %v940, %v1036
    %v1038 = vpop.f32.mrf.mxu0
    %1039 = vmatprep.mubr.bf16.mxu0 %v460
    %1040 = vmatmul.mubr.bf16.gmra.mxu0 %v459
    %v1041 = vpop.f32.mrf.mxu0
    %v1042 = vadd.f32 %v945, %v1041
    %v1043 = vpop.f32.mrf.mxu0
    %v1044 = vpop.f32.mrf.mxu0
    %v1045 = vadd.f32 %v948, %v1044
    %v1046 = vpop.f32.mrf.mxu0
    %1047 = vmatprep.mubr.bf16.mxu0 %v467
    %1048 = vmatmul.mubr.bf16.gmra.mxu0 %v466
    %v1049 = vpop.f32.mrf.mxu0
    %v1050 = vadd.f32 %v953, %v1049
    %v1051 = vpop.f32.mrf.mxu0
    %v1052 = vpop.f32.mrf.mxu0
    %v1053 = vadd.f32 %v956, %v1052
    %v1054 = vpop.f32.mrf.mxu0
    %1055 = vmatprep.mubr.bf16.mxu0 %v474
    %1056 = vmatmul.mubr.bf16.gmra.mxu0 %v473
    %v1057 = vpop.f32.mrf.mxu0
    %v1058 = vadd.f32 %v961, %v1057
    %v1059 = vpop.f32.mrf.mxu0
    %v1060 = vpop.f32.mrf.mxu0
    %v1061 = vadd.f32 %v964, %v1060
    %v1062 = vpop.f32.mrf.mxu0
    %1063 = vdwg.mxu0
    %1064 = vmatprep.subr.bf16.mxu0 0
    %1065 = vmatpush1.bf16.msra.mxu0 %v797
    %1066 = vmatprep.subr.bf16.mxu0 0
    %1067 = vmatpush1.bf16.msra.mxu0 %v796
    %1068 = vmatprep.subr.bf16.mxu0 0
    %1069 = vmatpush1.bf16.msra.mxu0 %v795
    %1070 = vmatprep.subr.bf16.mxu0 0
    %1071 = vmatpush1.bf16.msra.mxu0 %v794
    %1072 = vmatprep.subr.bf16.mxu0 0
    %1073 = vmatpush1.bf16.msra.mxu0 %v793
    %1074 = vmatprep.subr.bf16.mxu0 0
    %1075 = vmatpush1.bf16.msra.mxu0 %v792
    %1076 = vmatprep.subr.bf16.mxu0 0
    %1077 = vmatpush1.bf16.msra.mxu0 %v791
    %1078 = vmatprep.subr.bf16.mxu0 0
    %1079 = vmatpush1.bf16.msra.mxu0 %v790
    %1080 = vmatprep.subr.bf16.mxu0 0
    %1081 = vmatpush2.bf16.msra.mxu0 %v805
    %1082 = vmatprep.subr.bf16.mxu0 0
    %1083 = vmatpush2.bf16.msra.mxu0 %v804
    %1084 = vmatprep.subr.bf16.mxu0 0
    %1085 = vmatpush2.bf16.msra.mxu0 %v803
    %1086 = vmatprep.subr.bf16.mxu0 0
    %1087 = vmatpush2.bf16.msra.mxu0 %v802
    %1088 = vmatprep.subr.bf16.mxu0 0
    %1089 = vmatpush2.bf16.msra.mxu0 %v801
    %1090 = vmatprep.subr.bf16.mxu0 0
    %1091 = vmatpush2.bf16.msra.mxu0 %v800
    %1092 = vmatprep.subr.bf16.mxu0 0
    %1093 = vmatpush2.bf16.msra.mxu0 %v799
    %1094 = vmatprep.subr.bf16.mxu0 0
    %1095 = vmatpush2.bf16.msra.mxu0 %v798
    %1096 = vmatprep.mubr.bf16.mxu0 %v427
    %1097 = vmatmul.mubr.bf16.gmra.mxu0 %v426
    %v1098 = vpop.f32.mrf.mxu0
    %v1099 = vadd.f32 %v1002, %v1098
    %v1100 = vpop.f32.mrf.mxu0
    %v1101 = vpop.f32.mrf.mxu0
    %v1102 = vadd.f32 %v1005, %v1101
    %v1103 = vpop.f32.mrf.mxu0
    %1104 = vmatprep.mubr.bf16.mxu0 %v434
    %1105 = vmatmul.mubr.bf16.gmra.mxu0 %v433
    %v1106 = vpop.f32.mrf.mxu0
    %v1107 = vadd.f32 %v1010, %v1106
    %v1108 = vpop.f32.mrf.mxu0
    %v1109 = vpop.f32.mrf.mxu0
    %v1110 = vadd.f32 %v1013, %v1109
    %v1111 = vpop.f32.mrf.mxu0
    %1112 = vmatprep.mubr.bf16.mxu0 %v441
    %1113 = vmatmul.mubr.bf16.gmra.mxu0 %v440
    %v1114 = vpop.f32.mrf.mxu0
    %v1115 = vadd.f32 %v1018, %v1114
    %v1116 = vpop.f32.mrf.mxu0
    %v1117 = vpop.f32.mrf.mxu0
    %v1118 = vadd.f32 %v1021, %v1117
    %v1119 = vpop.f32.mrf.mxu0
    %1120 = vmatprep.mubr.bf16.mxu0 %v448
    %1121 = vmatmul.mubr.bf16.gmra.mxu0 %v447
    %v1122 = vpop.f32.mrf.mxu0
    %v1123 = vadd.f32 %v1026, %v1122
    %v1124 = vpop.f32.mrf.mxu0
    %v1125 = vpop.f32.mrf.mxu0
    %v1126 = vadd.f32 %v1029, %v1125
    %v1127 = vpop.f32.mrf.mxu0
    %1128 = vmatprep.mubr.bf16.mxu0 %v455
    %1129 = vmatmul.mubr.bf16.gmra.mxu0 %v454
    %v1130 = vpop.f32.mrf.mxu0
    %v1131 = vadd.f32 %v1034, %v1130
    %v1132 = vpop.f32.mrf.mxu0
    %v1133 = vpop.f32.mrf.mxu0
    %v1134 = vadd.f32 %v1037, %v1133
    %v1135 = vpop.f32.mrf.mxu0
    %1136 = vmatprep.mubr.bf16.mxu0 %v462
    %1137 = vmatmul.mubr.bf16.gmra.mxu0 %v461
    %v1138 = vpop.f32.mrf.mxu0
    %v1139 = vadd.f32 %v1042, %v1138
    %v1140 = vpop.f32.mrf.mxu0
    %v1141 = vpop.f32.mrf.mxu0
    %v1142 = vadd.f32 %v1045, %v1141
    %v1143 = vpop.f32.mrf.mxu0
    %1144 = vmatprep.mubr.bf16.mxu0 %v469
    %1145 = vmatmul.mubr.bf16.gmra.mxu0 %v468
    %v1146 = vpop.f32.mrf.mxu0
    %v1147 = vadd.f32 %v1050, %v1146
    %v1148 = vpop.f32.mrf.mxu0
    %v1149 = vpop.f32.mrf.mxu0
    %v1150 = vadd.f32 %v1053, %v1149
    %v1151 = vpop.f32.mrf.mxu0
    %1152 = vmatprep.mubr.bf16.mxu0 %v476
    %1153 = vmatmul.mubr.bf16.gmra.mxu0 %v475
    %v1154 = vpop.f32.mrf.mxu0
    %v1155 = vadd.f32 %v1058, %v1154
    %v1156 = vpop.f32.mrf.mxu0
    %v1157 = vpop.f32.mrf.mxu0
    %v1158 = vadd.f32 %v1061, %v1157
    %v1159 = vpop.f32.mrf.mxu0
    %1160 = vdwg.mxu0
    %1161 = vmatprep.subr.bf16.mxu0 0
    %1162 = vmatpush1.bf16.msra.mxu0 %v813
    %1163 = vmatprep.subr.bf16.mxu0 0
    %1164 = vmatpush1.bf16.msra.mxu0 %v812
    %1165 = vmatprep.subr.bf16.mxu0 0
    %1166 = vmatpush1.bf16.msra.mxu0 %v811
    %1167 = vmatprep.subr.bf16.mxu0 0
    %1168 = vmatpush1.bf16.msra.mxu0 %v810
    %1169 = vmatprep.subr.bf16.mxu0 0
    %1170 = vmatpush1.bf16.msra.mxu0 %v809
    %1171 = vmatprep.subr.bf16.mxu0 0
    %1172 = vmatpush1.bf16.msra.mxu0 %v808
    %1173 = vmatprep.subr.bf16.mxu0 0
    %1174 = vmatpush1.bf16.msra.mxu0 %v807
    %1175 = vmatprep.subr.bf16.mxu0 0
    %1176 = vmatpush1.bf16.msra.mxu0 %v806
    %1177 = vmatprep.subr.bf16.mxu0 0
    %1178 = vmatpush2.bf16.msra.mxu0 0
    %1179 = vmatprep.subr.bf16.mxu0 0
    %1180 = vmatpush2.bf16.msra.mxu0 0
    %1181 = vmatprep.subr.bf16.mxu0 0
    %1182 = vmatpush2.bf16.msra.mxu0 0
    %1183 = vmatprep.subr.bf16.mxu0 0
    %1184 = vmatpush2.bf16.msra.mxu0 0
    %1185 = vmatprep.subr.bf16.mxu0 0
    %1186 = vmatpush2.bf16.msra.mxu0 0
    %1187 = vmatprep.subr.bf16.mxu0 0
    %1188 = vmatpush2.bf16.msra.mxu0 0
    %1189 = vmatprep.subr.bf16.mxu0 0
    %1190 = vmatpush2.bf16.msra.mxu0 0
    %1191 = vmatprep.subr.bf16.mxu0 0
    %1192 = vmatpush2.bf16.msra.mxu0 0
    %1193 = vmatprep.mubr.bf16.mxu0 0
    %1194 = vmatmul.mubr.bf16.gmra.mxu0 %v428
    %v1195 = vpop.f32.mrf.mxu0
    %v1196 = vadd.f32 %v1099, %v1195
    %v1197 = vpop.f32.mrf.mxu0
    %v1198 = vpop.f32.mrf.mxu0
    %v1199 = vadd.f32 %v1102, %v1198
    %v1200 = vpop.f32.mrf.mxu0
    %1201 = vmatprep.mubr.bf16.mxu0 0
    %1202 = vmatmul.mubr.bf16.gmra.mxu0 %v435
    %v1203 = vpop.f32.mrf.mxu0
    %v1204 = vadd.f32 %v1107, %v1203
    %v1205 = vpop.f32.mrf.mxu0
    %v1206 = vpop.f32.mrf.mxu0
    %v1207 = vadd.f32 %v1110, %v1206
    %v1208 = vpop.f32.mrf.mxu0
    %1209 = vmatprep.mubr.bf16.mxu0 0
    %1210 = vmatmul.mubr.bf16.gmra.mxu0 %v442
    %v1211 = vpop.f32.mrf.mxu0
    %v1212 = vadd.f32 %v1115, %v1211
    %v1213 = vpop.f32.mrf.mxu0
    %v1214 = vpop.f32.mrf.mxu0
    %v1215 = vadd.f32 %v1118, %v1214
    %v1216 = vpop.f32.mrf.mxu0
    %1217 = vmatprep.mubr.bf16.mxu0 0
    %1218 = vmatmul.mubr.bf16.gmra.mxu0 %v449
    %v1219 = vpop.f32.mrf.mxu0
    %v1220 = vadd.f32 %v1123, %v1219
    %v1221 = vpop.f32.mrf.mxu0
    %v1222 = vpop.f32.mrf.mxu0
    %v1223 = vadd.f32 %v1126, %v1222
    %v1224 = vpop.f32.mrf.mxu0
    %1225 = vmatprep.mubr.bf16.mxu0 0
    %1226 = vmatmul.mubr.bf16.gmra.mxu0 %v456
    %v1227 = vpop.f32.mrf.mxu0
    %v1228 = vadd.f32 %v1131, %v1227
    %v1229 = vpop.f32.mrf.mxu0
    %v1230 = vpop.f32.mrf.mxu0
    %v1231 = vadd.f32 %v1134, %v1230
    %v1232 = vpop.f32.mrf.mxu0
    %1233 = vmatprep.mubr.bf16.mxu0 0
    %1234 = vmatmul.mubr.bf16.gmra.mxu0 %v463
    %v1235 = vpop.f32.mrf.mxu0
    %v1236 = vadd.f32 %v1139, %v1235
    %v1237 = vpop.f32.mrf.mxu0
    %v1238 = vpop.f32.mrf.mxu0
    %v1239 = vadd.f32 %v1142, %v1238
    %v1240 = vpop.f32.mrf.mxu0
    %1241 = vmatprep.mubr.bf16.mxu0 0
    %1242 = vmatmul.mubr.bf16.gmra.mxu0 %v470
    %v1243 = vpop.f32.mrf.mxu0
    %v1244 = vadd.f32 %v1147, %v1243
    %v1245 = vpop.f32.mrf.mxu0
    %v1246 = vpop.f32.mrf.mxu0
    %v1247 = vadd.f32 %v1150, %v1246
    %v1248 = vpop.f32.mrf.mxu0
    %1249 = vmatprep.mubr.bf16.mxu0 0
    %1250 = vmatmul.mubr.bf16.gmra.mxu0 %v477
    %v1251 = vpop.f32.mrf.mxu0
    %v1252 = vadd.f32 %v1155, %v1251
    %v1253 = vpop.f32.mrf.mxu0
    %v1254 = vpop.f32.mrf.mxu0
    %v1255 = vadd.f32 %v1158, %v1254
    %v1256 = vpop.f32.mrf.mxu0
    %1257 = vdwg.mxu0
    %v1258 = vmax.f32 %v1196, 0.0
    %v1259 = vmax.f32 %v1199, 0.0
    %v1260 = vmax.f32 %v1204, 0.0
    %v1261 = vmax.f32 %v1207, 0.0
    %v1262 = vmax.f32 %v1212, 0.0
    %v1263 = vmax.f32 %v1215, 0.0
    %v1264 = vmax.f32 %v1220, 0.0
    %v1265 = vmax.f32 %v1223, 0.0
    %v1266 = vmax.f32 %v1228, 0.0
    %v1267 = vmax.f32 %v1231, 0.0
    %v1268 = vmax.f32 %v1236, 0.0
    %v1269 = vmax.f32 %v1239, 0.0
    %v1270 = vmax.f32 %v1244, 0.0
    %v1271 = vmax.f32 %v1247, 0.0
    %v1272 = vmax.f32 %v1252, 0.0
    %v1273 = vmax.f32 %v1255, 0.0
    %v1274 = vpack.c.bf16 %v1259, %v1258
    %v1275 = vpack.c.bf16 %v1261, %v1260
    %v1276 = vpack.c.bf16 %v1263, %v1262
    %v1277 = vpack.c.bf16 %v1265, %v1264
    %v1278 = vpack.c.bf16 %v1267, %v1266
    %v1279 = vpack.c.bf16 %v1269, %v1268
    %v1280 = vpack.c.bf16 %v1271, %v1270
    %v1281 = vpack.c.bf16 %v1273, %v1272
    %v1282 = vld [vmem:[#allocation7] sm:$0xf]
    %v1283 = vld [vmem:[#allocation7 + $0x4] sm:$0xf]
    %v1284 = vld [vmem:[#allocation7 + $0x8] sm:$0xf]
    %v1285 = vld [vmem:[#allocation7 + $0xc] sm:$0xf]
    %v1286 = vld [vmem:[#allocation7 + $0x10] sm:$0xf]
    %v1287 = vld [vmem:[#allocation7 + $0x14] sm:$0xf]
    %v1288 = vld [vmem:[#allocation7 + $0x18] sm:$0xf]
    %v1289 = vld [vmem:[#allocation7 + $0x1c] sm:$0xf]
    %v1290 = vld [vmem:[#allocation7 + $0x20] sm:$0xf]
    %v1291 = vld [vmem:[#allocation7 + $0x24] sm:$0xf]
    %v1292 = vld [vmem:[#allocation7 + $0x28] sm:$0xf]
    %v1293 = vld [vmem:[#allocation7 + $0x2c] sm:$0xf]
    %v1294 = vld [vmem:[#allocation7 + $0x30] sm:$0xf]
    %v1295 = vld [vmem:[#allocation7 + $0x34] sm:$0xf]
    %v1296 = vld [vmem:[#allocation7 + $0x38] sm:$0xf]
    %v1297 = vld [vmem:[#allocation7 + $0x3c] sm:$0xf]
    %v1298 = vld [vmem:[%s4] sm:$0x1]
    %v1300 = vlaneseq
    %v1301 = vshrl.u32 %v1300, 7
    %v1302 = vsub.s32 0, %v1301
    %v1303 = vrot.slane %v1298, %v1302
    %v1321 = vunpack.c.l.b16 %v1282
    %v1322 = vunpack.c.l.b16 %v1283
    %v1323 = vunpack.c.l.b16 %v1284
    %v1324 = vunpack.c.l.b16 %v1285
    %v1325 = vunpack.c.l.b16 %v1286
    %v1326 = vunpack.c.l.b16 %v1287
    %v1327 = vunpack.c.l.b16 %v1288
    %v1328 = vunpack.c.l.b16 %v1289
    %v1329 = vunpack.c.l.b16 %v1290
    %v1330 = vunpack.c.l.b16 %v1291
    %v1331 = vunpack.c.l.b16 %v1292
    %v1332 = vunpack.c.l.b16 %v1293
    %v1333 = vunpack.c.l.b16 %v1294
    %v1334 = vunpack.c.l.b16 %v1295
    %v1335 = vunpack.c.l.b16 %v1296
    %v1336 = vunpack.c.l.b16 %v1297
    %v1337 = vpack.c.b16 %v1322, %v1321
    %v1338 = vpack.c.b16 %v1324, %v1323
    %v1339 = vpack.c.b16 %v1326, %v1325
    %v1340 = vpack.c.b16 %v1328, %v1327
    %v1341 = vpack.c.b16 %v1330, %v1329
    %v1342 = vpack.c.b16 %v1332, %v1331
    %v1343 = vpack.c.b16 %v1334, %v1333
    %v1344 = vpack.c.b16 %v1336, %v1335
    %1353 = vmatprep.subr.bf16.mxu0 0
    %1354 = vmatpush1.bf16.msra.mxu0 %v1344
    %1355 = vmatprep.subr.bf16.mxu0 0
    %1356 = vmatpush1.bf16.msra.mxu0 %v1343
    %1357 = vmatprep.subr.bf16.mxu0 0
    %1358 = vmatpush1.bf16.msra.mxu0 %v1342
    %1359 = vmatprep.subr.bf16.mxu0 0
    %1360 = vmatpush1.bf16.msra.mxu0 %v1341
    %1361 = vmatprep.subr.bf16.mxu0 0
    %1362 = vmatpush1.bf16.msra.mxu0 %v1340
    %1363 = vmatprep.subr.bf16.mxu0 0
    %1364 = vmatpush1.bf16.msra.mxu0 %v1339
    %1365 = vmatprep.subr.bf16.mxu0 0
    %1366 = vmatpush1.bf16.msra.mxu0 %v1338
    %1367 = vmatprep.subr.bf16.mxu0 0
    %1368 = vmatpush1.bf16.msra.mxu0 %v1337
    %1369 = vmatprep.subr.bf16.mxu0 0
    %1370 = vmatpush2.bf16.msra.mxu0 0
    %1371 = vmatprep.subr.bf16.mxu0 0
    %1372 = vmatpush2.bf16.msra.mxu0 0
    %1373 = vmatprep.subr.bf16.mxu0 0
    %1374 = vmatpush2.bf16.msra.mxu0 0
    %1375 = vmatprep.subr.bf16.mxu0 0
    %1376 = vmatpush2.bf16.msra.mxu0 0
    %1377 = vmatprep.subr.bf16.mxu0 0
    %1378 = vmatpush2.bf16.msra.mxu0 0
    %1379 = vmatprep.subr.bf16.mxu0 0
    %1380 = vmatpush2.bf16.msra.mxu0 0
    %1381 = vmatprep.subr.bf16.mxu0 0
    %1382 = vmatpush2.bf16.msra.mxu0 0
    %1383 = vmatprep.subr.bf16.mxu0 0
    %1384 = vmatpush2.bf16.msra.mxu0 0
    %1385 = vmatprep.mubr.bf16.mxu0 0
    %1386 = vmatmul.mubr.bf16.gmra.mxu0 %v1274
    %v1387 = vpop.f32.mrf.mxu0
    %v1388 = vadd.f32 %v1303, %v1387
    %v1389 = vpop.f32.mrf.mxu0
    %v1390 = vpop.f32.mrf.mxu0
    %v1391 = vadd.f32 %v1303, %v1390
    %v1392 = vpop.f32.mrf.mxu0
    %1393 = vmatprep.mubr.bf16.mxu0 0
    %1394 = vmatmul.mubr.bf16.gmra.mxu0 %v1275
    %v1395 = vpop.f32.mrf.mxu0
    %v1396 = vadd.f32 %v1303, %v1395
    %v1397 = vpop.f32.mrf.mxu0
    %v1398 = vpop.f32.mrf.mxu0
    %v1399 = vadd.f32 %v1303, %v1398
    %v1400 = vpop.f32.mrf.mxu0
    %1401 = vmatprep.mubr.bf16.mxu0 0
    %1402 = vmatmul.mubr.bf16.gmra.mxu0 %v1276
    %v1403 = vpop.f32.mrf.mxu0
    %v1404 = vadd.f32 %v1303, %v1403
    %v1405 = vpop.f32.mrf.mxu0
    %v1406 = vpop.f32.mrf.mxu0
    %v1407 = vadd.f32 %v1303, %v1406
    %v1408 = vpop.f32.mrf.mxu0
    %1409 = vmatprep.mubr.bf16.mxu0 0
    %1410 = vmatmul.mubr.bf16.gmra.mxu0 %v1277
    %v1411 = vpop.f32.mrf.mxu0
    %v1412 = vadd.f32 %v1303, %v1411
    %v1413 = vpop.f32.mrf.mxu0
    %v1414 = vpop.f32.mrf.mxu0
    %v1415 = vadd.f32 %v1303, %v1414
    %v1416 = vpop.f32.mrf.mxu0
    %1417 = vmatprep.mubr.bf16.mxu0 0
    %1418 = vmatmul.mubr.bf16.gmra.mxu0 %v1278
    %v1419 = vpop.f32.mrf.mxu0
    %v1420 = vadd.f32 %v1303, %v1419
    %v1421 = vpop.f32.mrf.mxu0
    %v1422 = vpop.f32.mrf.mxu0
    %v1423 = vadd.f32 %v1303, %v1422
    %v1424 = vpop.f32.mrf.mxu0
    %1425 = vmatprep.mubr.bf16.mxu0 0
    %1426 = vmatmul.mubr.bf16.gmra.mxu0 %v1279
    %v1427 = vpop.f32.mrf.mxu0
    %v1428 = vadd.f32 %v1303, %v1427
    %v1429 = vpop.f32.mrf.mxu0
    %v1430 = vpop.f32.mrf.mxu0
    %v1431 = vadd.f32 %v1303, %v1430
    %v1432 = vpop.f32.mrf.mxu0
    %1433 = vmatprep.mubr.bf16.mxu0 0
    %1434 = vmatmul.mubr.bf16.gmra.mxu0 %v1280
    %v1435 = vpop.f32.mrf.mxu0
    %v1436 = vadd.f32 %v1303, %v1435
    %v1437 = vpop.f32.mrf.mxu0
    %v1438 = vpop.f32.mrf.mxu0
    %v1439 = vadd.f32 %v1303, %v1438
    %v1440 = vpop.f32.mrf.mxu0
    %1441 = vmatprep.mubr.bf16.mxu0 0
    %1442 = vmatmul.mubr.bf16.gmra.mxu0 %v1281
    %v1443 = vpop.f32.mrf.mxu0
    %v1444 = vadd.f32 %v1303, %v1443
    %v1445 = vpop.f32.mrf.mxu0
    %v1446 = vpop.f32.mrf.mxu0
    %v1447 = vadd.f32 %v1303, %v1446
    %v1448 = vpop.f32.mrf.mxu0
    %1449 = vdwg.mxu0
    %1450 = vst [vmem:[#allocation8] sm:$0xff] %v1388
    %1451 = vst [vmem:[#allocation8 + $0x8] sm:$0xff] %v1391
    %1452 = vst [vmem:[#allocation8 + $0x10] sm:$0xff] %v1396
    %1453 = vst [vmem:[#allocation8 + $0x18] sm:$0xff] %v1399
    %1454 = vst [vmem:[#allocation8 + $0x20] sm:$0xff] %v1404
    %1455 = vst [vmem:[#allocation8 + $0x28] sm:$0xff] %v1407
    %1456 = vst [vmem:[#allocation8 + $0x30] sm:$0xff] %v1412
    %1457 = vst [vmem:[#allocation8 + $0x38] sm:$0xff] %v1415
    %1458 = vst [vmem:[#allocation8 + $0x40] sm:$0xff] %v1420
    %1459 = vst [vmem:[#allocation8 + $0x48] sm:$0xff] %v1423
    %1460 = vst [vmem:[#allocation8 + $0x50] sm:$0xff] %v1428
    %1461 = vst [vmem:[#allocation8 + $0x58] sm:$0xff] %v1431
    %1462 = vst [vmem:[#allocation8 + $0x60] sm:$0xff] %v1436
    %1463 = vst [vmem:[#allocation8 + $0x68] sm:$0xff] %v1439
    %1464 = vst [vmem:[#allocation8 + $0x70] sm:$0xff] %v1444
    %1465 = vst [vmem:[#allocation8 + $0x78] sm:$0xff] %v1447
    // Predicated region
    $region34: #{tpu_custom_call.1} parent=1 // pred_check
      _
    $region35: #{tpu_custom_call.1} parent=1 // pred_check_branch
      %1467 = sbr.rel (0) target = $region37
    $region36: #{tpu_custom_call.1} parent=1 // pred_region
      %s1469 = ssub.s32 2048, 2048
      %1470 = vsyncadd [#allocation4], %s1469
      %s1471 = sshll.u32 [#allocation8], 4
      %s1472 = int_to_ptr.vmem [resolvable:$true] %s1471
      %1477 = dma.vmem_to_hbm [thread:$0]  %s1472, 2048, %s5, [#allocation4], 128, 128, 8
    $region37: #{tpu_custom_call.1} parent=1 // pred_fallthru
      _
    // Predicated region
    $region38: #{tpu_custom_call.1} parent=1 // pred_check
      _
    $region39: #{tpu_custom_call.1} parent=1 // pred_check_branch
      %1479 = sbr.rel (0) target = $region41
    $region40: #{tpu_custom_call.1} parent=1 // pred_region
      %1480 = dma.done [#allocation4], 2048
    $region41: #{tpu_custom_call.1} parent=1 // pred_fallthru
      _
    %1481 = vsyncpa [#allocation3], 1
    %1482 = vsyncpa [#allocation6], 1
    %1483 = vsyncpa [#allocation4], 1

</llo_original>
